<compile_context>
chip_gen: v5e
topology: v5e:2x2
jax: 0.10.0
libtpu: 0.0.40
codegen_flags: <defaults>
</compile_context>

<pallas_src>
import functools

import jax
import jax.numpy as jnp
import numpy as np
from jax.experimental import pallas as pl
from jax.experimental.pallas import tpu as pltpu

_LANES = 128
_SUB = 8
_MAX_BLOCK_ROWS = 2048            # 2048x128 f32 = 1 MiB per input per buffer
_EPS = 1e-4
_LOG_EPS = float(np.log(_EPS))            # log(1e-4)
_LOG_1M_EPS = float(np.log1p(-_EPS))      # log(1 - 1e-4)
_VMEM_LIMIT = 48 * 1024 * 1024            # < 64 MiB physical on v7x


# -----------------------------------------------------------------------------
# Focal loss kernel (elementwise + reduction hot path, sigmoid fused in-kernel)
# -----------------------------------------------------------------------------
def _focal_kernel(x_ref, gt_ref, uc_ref, out_ref, *,
                  total_elems, blocks_per_core, mask_from_block):
    c = pl.program_id(0)          # TensorCore split ("parallel")
    j = pl.program_id(1)          # serial reduction axis within a core

    @pl.when(j == 0)
    def _init():
        out_ref[...] = jnp.zeros(out_ref.shape, out_ref.dtype)

    block_rows = x_ref.shape[0]
    gb = c * blocks_per_core + j                      # global block index

    def _accumulate(x, gt, uc):
        # _sigmoid(): clamp(sigmoid(x), 1e-4, 1-1e-4), fused via the
        # log-sigmoid identity; clipping in the log domain matches clipping
        # pred and then taking the log.
        e = jnp.exp(-jnp.abs(x))
        lse = jnp.log(1.0 + e)                        # softplus(-|x|)
        log_pred_u = jnp.minimum(x, 0.0) - lse        # log(sigmoid(x))
        log_1m_pred_u = -jnp.maximum(x, 0.0) - lse    # log(1 - sigmoid(x))
        log_pred = jnp.clip(log_pred_u, _LOG_EPS, _LOG_1M_EPS)
        log_1m_pred = jnp.clip(log_1m_pred_u, _LOG_EPS, _LOG_1M_EPS)
        # Squared modulating factors via exp (EUP slot has slack) instead of
        # a VALU divide; the clip on pred itself is dropped (it only feeds the
        # quadratic factors - difference is O(1e-12) in the saturated regime).
        pred_sq = jnp.exp(2.0 * log_pred_u)           # sigmoid(x)**2
        one_m_pred_sq = jnp.exp(2.0 * log_1m_pred_u)  # (1 - sigmoid(x))**2

        pos = (gt == 1.0).astype(jnp.float32)
        neg = (gt < 1.0).astype(jnp.float32)
        neg_w = jnp.square(jnp.square(1.0 - gt))      # (1 - gt) ** 4
        pos_loss = log_pred * one_m_pred_sq * pos
        # TODO(synk): exact FocalLoss(pred, gt, unconf_hm) source unavailable;
        # unconf_hm is assumed to down-weight the negative/background term.
        neg_loss = log_1m_pred * pred_sq * neg_w * neg * (1.0 - uc)
        loss = pos_loss + neg_loss

        # Accumulate into full (8,128) vreg tiles: pure VPU adds, final tiny
        # reduction happens once in the wrapper.
        g = block_rows // _SUB
        out_ref[0] += loss.reshape(g, _SUB, _LANES).sum(axis=0)
        out_ref[1] += pos.reshape(g, _SUB, _LANES).sum(axis=0)

    # Native-dtype (e.g. bf16) loads; cast to f32 after the load.
    x = x_ref[...].astype(jnp.float32)
    gt = gt_ref[...].astype(jnp.float32)
    uc = uc_ref[...].astype(jnp.float32)

    if mask_from_block is None:
        # Common CenterNet case: the grid exactly tiles the data -> no masking.
        _accumulate(x, gt, uc)
    else:
        @pl.when(gb < mask_from_block)
        def _full():
            _accumulate(x, gt, uc)

        @pl.when(gb >= mask_from_block)
        def _tail():
            # Only tail / phantom blocks pay for the iota + select chain.
            r = jax.lax.broadcasted_iota(jnp.int32, (block_rows, _LANES), 0)
            l = jax.lax.broadcasted_iota(jnp.int32, (block_rows, _LANES), 1)
            # int32 flat index: fine for any realistic heatmap (< 2^31 elems).
            elem = (gb * block_rows + r) * _LANES + l
            valid = elem < total_elems
            _accumulate(jnp.where(valid, x, 0.0),
                        jnp.where(valid, gt, 1.5),    # 1.5 -> neither pos nor neg
                        jnp.where(valid, uc, 0.0))


@jax.jit
def focal_loss_pallas(hm_logits, gt_hm, unconf_hm):
    total = int(np.prod(hm_logits.shape))
    chunk = _SUB * _LANES
    total_pad = ((total + chunk - 1) // chunk) * chunk

    def _prep(a):
        a = a.reshape(-1)                 # free reshape; keep native dtype
        if total_pad != total:
            # Rare path (CenterNet maps are always a multiple of 8*128);
            # the padded elements are masked inside the kernel anyway.
            a = jnp.pad(a, (0, total_pad - total))
        return a.reshape(total_pad // _LANES, _LANES)

    x2, g2, u2 = _prep(hm_logits), _prep(gt_hm), _prep(unconf_hm)

    rows = total_pad // _LANES                        # multiple of 8
    block_rows = min(_MAX_BLOCK_ROWS, rows)           # mult of 16 when < rows
    n_blocks = int(pl.cdiv(rows, block_rows))
    # Unconditional 2-way TensorCore split (v7x megacore).  On single-TC chips
    # the outer axis is just a harmless serial dimension.
    n_cores = 2 if n_blocks >= 2 else 1
    bpc = int(pl.cdiv(n_blocks, n_cores))
    covered = n_cores * bpc * block_rows * _LANES
    # Trace-time specialization: masking code is only emitted when the grid
    # over-covers the true element count.
    mask_from_block = None if covered == total else total // (block_rows * _LANES)

    kernel = functools.partial(_focal_kernel, total_elems=total,
                               blocks_per_core=bpc,
                               mask_from_block=mask_from_block)

    def _in_map(c, j):
        # Clamp phantom blocks (when n_cores*bpc > n_blocks) onto the last real
        # block; the kernel masks their contribution to zero.
        return (jnp.minimum(c * bpc + j, n_blocks - 1), 0)

    out = pl.pallas_call(
        kernel,
        out_shape=jax.ShapeDtypeStruct((n_cores * 2, _SUB, _LANES), jnp.float32),
        grid=(n_cores, bpc),
        in_specs=[pl.BlockSpec((block_rows, _LANES), _in_map)] * 3,
        out_specs=pl.BlockSpec((2, _SUB, _LANES), lambda c, j: (c, 0, 0)),
        compiler_params=pltpu.CompilerParams(
            dimension_semantics=("parallel", "arbitrary"),
            vmem_limit_bytes=_VMEM_LIMIT),
    )(x2, g2, u2)

    out = out.reshape(n_cores, 2, _SUB, _LANES)
    loss_sum = jnp.sum(out[:, 0])
    num_pos = jnp.sum(out[:, 1])
    # pos_loss is identically 0 when num_pos == 0, so the reference's
    # `-neg_loss` fallback collapses to the same expression.
    return -loss_sum / jnp.maximum(num_pos, 1.0)


# -----------------------------------------------------------------------------
# Fused RegL1Loss kernel for the 'wh' + 'reg' heads
# (per-batch (C, H*W) slab, one-hot gather on the MXU; no per-row DMAs)
# -----------------------------------------------------------------------------
def _regl1_fused_kernel(ind_ref, mask_ref, wht_ref, regt_ref, whf_ref, regf_ref,
                        out_ref, *, c_wh, c_off):
    idx = ind_ref[0]                                      # (K, 1) int32
    m = mask_ref[0].astype(jnp.float32)                   # (K, 1)
    K = idx.shape[0]
    HW = whf_ref.shape[2]

    # One-hot gather matrix; the gather itself runs on the MXU (one small
    # matmul per head) instead of B*K descriptor-bound 16-byte DMAs.
    # TODO(synk): for very large K*HW, chunk the one-hot over HW to bound VMEM.
    lane = jax.lax.broadcasted_iota(jnp.int32, (K, HW), 1)
    onehot = (lane == idx).astype(jnp.float32)            # (K, HW)

    def _head(feat_ref, tgt_ref):
        feat = feat_ref[0].astype(jnp.float32)            # (C, HW)
        pred = jnp.einsum('kh,ch->kc', onehot, feat,
                          precision=jax.lax.Precision.HIGHEST,
                          preferred_element_type=jnp.float32)   # (K, C) exact
        tgt = tgt_ref[0].astype(jnp.float32)              # (K, C)
        d = jnp.abs(pred * m - tgt * m)
        return jnp.sum(d, axis=0, keepdims=True)          # (1, C) per-chan sums

    out_ref[0, :, 0:c_wh] = _head(whf_ref, wht_ref)
    out_ref[0, :, c_wh:c_wh + c_off] = _head(regf_ref, regt_ref)


@jax.jit
def reg_l1_losses_pallas(wh_out, reg_out, reg_mask, ind, wh_target, reg_target):
    """Fused RegL1Loss for the 'wh' and 'reg' heads (shared ind / reg_mask)."""
    B, c_wh, H, W = wh_out.shape
    c_off = reg_out.shape[1]
    HW = H * W
    K = ind.shape[1]
    C = c_wh + c_off

    # (B, C, H*W): a free reshape of NCHW -> C stays on sublanes, H*W is
    # lane-dense (no 32x lane padding, no host transpose / concat / f32 copy).
    wh_feat = wh_out.reshape(B, c_wh, HW)
    reg_feat = reg_out.reshape(B, c_off, HW)
    ind3 = ind.astype(jnp.int32).reshape(B, K, 1)
    mask3 = reg_mask.reshape(B, K, 1)

    kernel = functools.partial(_regl1_fused_kernel, c_wh=c_wh, c_off=c_off)
    out = pl.pallas_call(
        kernel,
        out_shape=jax.ShapeDtypeStruct((B, 1, C), jnp.float32),
        grid=(B,),
        in_specs=[
            pl.BlockSpec((1, K, 1), lambda b: (b, 0, 0)),       # ind
            pl.BlockSpec((1, K, 1), lambda b: (b, 0, 0)),       # reg_mask
            pl.BlockSpec((1, K, c_wh), lambda b: (b, 0, 0)),    # wh target
            pl.BlockSpec((1, K, c_off), lambda b: (b, 0, 0)),   # reg target
            pl.BlockSpec((1, c_wh, HW), lambda b: (b, 0, 0)),   # wh feature map
            pl.BlockSpec((1, c_off, HW), lambda b: (b, 0, 0)),  # reg feature map
        ],
        out_specs=pl.BlockSpec((1, 1, C), lambda b: (b, 0, 0)),
        compiler_params=pltpu.CompilerParams(
            dimension_semantics=("parallel",),
            vmem_limit_bytes=_VMEM_LIMIT),
    )(ind3, mask3, wh_target, reg_target, wh_feat, reg_feat)

    per_ch = jnp.sum(out.reshape(B, C), axis=0)               # (C,)
    msum = jnp.sum(reg_mask.astype(jnp.float32))
    # RegL1Loss: sum(|pred*m - target*m|) / (sum(channel-expanded mask) + 1e-4)
    wh_loss = jnp.sum(per_ch[:c_wh]) / (msum * c_wh + 1e-4)
    off_loss = jnp.sum(per_ch[c_wh:]) / (msum * c_off + 1e-4)
    return wh_loss, off_loss


# -----------------------------------------------------------------------------
# Pure-JAX references (for correctness check)
# -----------------------------------------------------------------------------
def focal_loss_ref(logits, gt, unconf):
    pred = jnp.clip(jax.nn.sigmoid(logits.astype(jnp.float32)), 1e-4, 1.0 - 1e-4)
    gt = gt.astype(jnp.float32)
    unconf = unconf.astype(jnp.float32)
    pos = (gt == 1.0).astype(jnp.float32)
    neg = (gt < 1.0).astype(jnp.float32)
    neg_w = (1.0 - gt) ** 4
    pos_loss = jnp.sum(jnp.log(pred) * (1.0 - pred) ** 2 * pos)
    neg_loss = jnp.sum(jnp.log(1.0 - pred) * pred ** 2 * neg_w * neg * (1.0 - unconf))
    num_pos = jnp.sum(pos)
    return jnp.where(num_pos > 0,
                     -(pos_loss + neg_loss) / jnp.maximum(num_pos, 1.0),
                     -neg_loss)


def reg_l1_loss_ref(output_map, mask, ind, target):
    B, C, H, W = output_map.shape
    feat = jnp.transpose(output_map, (0, 2, 3, 1)).reshape(B, H * W, C)
    pred = feat[jnp.arange(B)[:, None], ind, :].astype(jnp.float32)     # (B, K, C)
    m = jnp.broadcast_to(mask[:, :, None].astype(jnp.float32), pred.shape)
    loss = jnp.sum(jnp.abs(pred * m - target.astype(jnp.float32) * m))
    return loss / (jnp.sum(m) + 1e-4)


def reg_pair_ref(wh_out, reg_out, reg_mask, ind, wh_t, reg_t):
    return (reg_l1_loss_ref(wh_out, reg_mask, ind, wh_t),
            reg_l1_loss_ref(reg_out, reg_mask, ind, reg_t))


# -----------------------------------------------------------------------------
# CtdetLoss forward
# -----------------------------------------------------------------------------
class Opt:
    num_stacks = 1
    mse_loss = False
    reg_loss = "l1"
    dense_wh = False
    norm_wh = False
    cat_spec_wh = False
    eval_oracle_hm = False
    eval_oracle_wh = False
    eval_oracle_offset = False
    task = "ctdet"          # sem_seg branch inactive -> sem_seg_loss = 0
    reg_offset = True
    hm_weight = 1.0
    wh_weight = 0.1
    off_weight = 1.0


def ctdet_loss_forward(outputs, batch, opt, focal_fn, reg_pair_fn):
    hm_loss, wh_loss, off_loss, sem_seg_loss = 0.0, 0.0, 0.0, 0.0
    for s in range(opt.num_stacks):
        output = outputs[s]
        # (_sigmoid on output['hm'] is fused inside the focal kernel)
        hm_loss += focal_fn(output["hm"], batch["hm"], batch["unconf_hm"]) / opt.num_stacks
        need_wh = opt.wh_weight > 0
        need_off = opt.reg_offset and opt.off_weight > 0
        if need_wh or need_off:
            wl, ol = reg_pair_fn(output["wh"], output["reg"], batch["reg_mask"],
                                 batch["ind"], batch["wh"], batch["reg"])
            if need_wh:
                wh_loss += wl / opt.num_stacks
            if need_off:
                off_loss += ol / opt.num_stacks
        # TODO(synk): CrossEntropy2d semseg branch and eval_oracle_* CPU
        # round-trips are only active for other configs; not implemented here.
    loss = (opt.hm_weight * hm_loss + opt.wh_weight * wh_loss
            + opt.off_weight * off_loss + sem_seg_loss)
    loss_stats = {"loss": loss, "hm_loss": hm_loss, "wh_loss": wh_loss,
                  "off_loss": off_loss, "sem_seg_loss": sem_seg_loss}
    return loss, loss_stats


if __name__ == "__main__":
    key = jax.random.PRNGKey(0)
    B, C_HM, H, W, K = 2, 4, 16, 16, 8
    keys = jax.random.split(key, 8)

    # network outputs (one stack)
    hm_logits = jax.random.normal(keys[0], (B, C_HM, H, W), jnp.float32)
    wh_out = jax.random.normal(keys[1], (B, 2, H, W), jnp.float32) * 2.0
    reg_out = jax.random.normal(keys[2], (B, 2, H, W), jnp.float32) * 0.5

    # ground-truth batch
    gt_hm = jax.random.uniform(keys[3], (B, C_HM, H, W), jnp.float32, 0.0, 0.9)
    gt_hm = gt_hm.at[:, :, 4, 4].set(1.0)          # exact object-center peaks
    gt_hm = gt_hm.at[0, 1, 10, 7].set(1.0)
    unconf_hm = (jax.random.uniform(keys[4], (B, C_HM, H, W)) < 0.1).astype(jnp.float32)
    ind = jax.random.randint(keys[5], (B, K), 0, H * W, jnp.int32)
    reg_mask = (jnp.arange(K)[None, :] < jnp.array([[5], [3]])).astype(jnp.float32)
    wh_t = jax.random.uniform(keys[6], (B, K, 2), jnp.float32, 0.0, 8.0)
    reg_t = jax.random.uniform(keys[7], (B, K, 2), jnp.float32)

    outputs = [{"hm": hm_logits, "wh": wh_out, "reg": reg_out}]
    batch = {"hm": gt_hm, "unconf_hm": unconf_hm, "reg_mask": reg_mask,
             "ind": ind, "wh": wh_t, "reg": reg_t}
    opt = Opt()

    loss, stats = ctdet_loss_forward(outputs, batch, opt,
                                     focal_loss_pallas, reg_l1_losses_pallas)
    loss = jax.block_until_ready(loss)

    ref_loss, ref_stats = ctdet_loss_forward(outputs, batch, opt,
                                             focal_loss_ref, reg_pair_ref)
    np.testing.assert_allclose(np.asarray(loss), np.asarray(ref_loss),
                               rtol=1e-4, atol=1e-4)
    for name in ("hm_loss", "wh_loss", "off_loss"):
        np.testing.assert_allclose(np.asarray(stats[name]),
                                   np.asarray(ref_stats[name]),
                                   rtol=1e-4, atol=1e-4)

    # num_pos == 0 branch (merged-accumulator fallback must stay exact).
    fl0 = jax.block_until_ready(focal_loss_pallas(hm_logits, gt_hm * 0.5, unconf_hm))
    np.testing.assert_allclose(
        np.asarray(fl0),
        np.asarray(focal_loss_ref(hm_logits, gt_hm * 0.5, unconf_hm)),
        rtol=1e-4, atol=1e-4)

    # Focal hot path at larger shape: multi-block grid, unconditional 2-way
    # core split, partial (masked) tail block, clamped phantom block, and
    # native bf16 logits (no host-side f32 copy).
    k2 = jax.random.split(jax.random.PRNGKey(1), 3)
    B2, C2, H2, W2 = 10, 4, 128, 128
    logits2 = jax.random.normal(k2[0], (B2, C2, H2, W2), jnp.float32).astype(jnp.bfloat16)
    gt2 = jax.random.uniform(k2[1], (B2, C2, H2, W2), jnp.float32, 0.0, 0.9)
    gt2 = gt2.at[:, :, 7, 9].set(1.0)
    uc2 = (jax.random.uniform(k2[2], (B2, C2, H2, W2)) < 0.1).astype(jnp.float32)
    fl_p = jax.block_until_ready(focal_loss_pallas(logits2, gt2, uc2))
    fl_r = focal_loss_ref(logits2.astype(jnp.float32), gt2, uc2)
    np.testing.assert_allclose(np.asarray(fl_p), np.asarray(fl_r),
                               rtol=1e-4, atol=1e-4)

    print("KERNEL_OK")
</pallas_src>

<mosaic_0001>
module attributes {stable_mosaic.version = 11 : i64} {
  func.func @_focal_kernel(%arg0: i32, %arg1: i32, %arg2: memref<16x128xf32, #tpu.memory_space<vmem>>, %arg3: memref<16x128xf32, #tpu.memory_space<vmem>>, %arg4: memref<16x128xf32, #tpu.memory_space<vmem>>, %arg5: memref<2x8x128xf32, #tpu.memory_space<vmem>>) attributes {dimension_semantics = [#tpu.dimension_semantics<parallel>, #tpu.dimension_semantics<arbitrary>], iteration_bounds = array<i64: 1, 1>, scalar_prefetch = 0 : i64, scratch_operands = 0 : i64, tpu.core_type = #tpu.core_type<tc>, window_params = [{transform_indices = @transform_0, window_bounds = array<i64: 16, 128>}, {transform_indices = @transform_1, window_bounds = array<i64: 16, 128>}, {transform_indices = @transform_2, window_bounds = array<i64: 16, 128>}, {transform_indices = @transform_3, window_bounds = array<i64: 2, 8, 128>}]} {
    %c0_i32 = arith.constant 0 : i32
    %0 = arith.cmpi eq, %arg1, %c0_i32 : i32
    %1 = arith.extui %0 : i1 to i32
    %c0_i32_0 = arith.constant 0 : i32
    %2 = arith.cmpi ne, %1, %c0_i32_0 : i32
    scf.if %2 {
      %cst_33 = arith.constant 0.000000e+00 : f32
      %72 = vector.broadcast %cst_33 : f32 to vector<2x8x128xf32>
      %c0_34 = arith.constant 0 : index
      %c0_35 = arith.constant 0 : index
      %c0_36 = arith.constant 0 : index
      %73 = vector.load %arg5[%c0_34, %c0_35, %c0_36] : memref<2x8x128xf32, #tpu.memory_space<vmem>>, vector<2x8x128xf32>
      tpu.vector_store %arg5[%c0_34, %c0_35, %c0_36], %72 {strides = array<i32>} : memref<2x8x128xf32, #tpu.memory_space<vmem>>, vector<2x8x128xf32>,
    } else {
    }
    %c0 = arith.constant 0 : index
    %c0_1 = arith.constant 0 : index
    %3 = vector.load %arg2[%c0, %c0_1] : memref<16x128xf32, #tpu.memory_space<vmem>>, vector<16x128xf32>
    %c0_2 = arith.constant 0 : index
    %c0_3 = arith.constant 0 : index
    %4 = vector.load %arg3[%c0_2, %c0_3] : memref<16x128xf32, #tpu.memory_space<vmem>>, vector<16x128xf32>
    %c0_4 = arith.constant 0 : index
    %c0_5 = arith.constant 0 : index
    %5 = vector.load %arg4[%c0_4, %c0_5] : memref<16x128xf32, #tpu.memory_space<vmem>>, vector<16x128xf32>
    %6 = math.absf %3 : vector<16x128xf32>
    %cst = arith.constant 0.000000e+00 : f32
    %7 = vector.broadcast %cst : f32 to vector<16x128xf32>
    %8 = arith.subf %7, %6 : vector<16x128xf32>
    %9 = math.exp %8 : vector<16x128xf32>
    %cst_6 = arith.constant 1.000000e+00 : f32
    %10 = vector.broadcast %cst_6 : f32 to vector<16x128xf32>
    %11 = arith.addf %10, %9 : vector<16x128xf32>
    %12 = math.log %11 : vector<16x128xf32>
    %cst_7 = arith.constant 0.000000e+00 : f32
    %13 = vector.broadcast %cst_7 : f32 to vector<16x128xf32>
    %14 = arith.minimumf %3, %13 : vector<16x128xf32>
    %15 = arith.subf %14, %12 : vector<16x128xf32>
    %cst_8 = arith.constant 0.000000e+00 : f32
    %16 = vector.broadcast %cst_8 : f32 to vector<16x128xf32>
    %17 = arith.maximumf %3, %16 : vector<16x128xf32>
    %cst_9 = arith.constant 0.000000e+00 : f32
    %18 = vector.broadcast %cst_9 : f32 to vector<16x128xf32>
    %19 = arith.subf %18, %17 : vector<16x128xf32>
    %20 = arith.subf %19, %12 : vector<16x128xf32>
    %cst_10 = arith.constant -9.21034049 : f32
    %cst_11 = arith.constant -1.000050e-04 : f32
    %21 = vector.broadcast %cst_10 : f32 to vector<16x128xf32>
    %22 = arith.maximumf %21, %15 : vector<16x128xf32>
    %23 = vector.broadcast %cst_11 : f32 to vector<16x128xf32>
    %24 = arith.minimumf %23, %22 : vector<16x128xf32>
    %cst_12 = arith.constant -9.21034049 : f32
    %cst_13 = arith.constant -1.000050e-04 : f32
    %25 = vector.broadcast %cst_12 : f32 to vector<16x128xf32>
    %26 = arith.maximumf %25, %20 : vector<16x128xf32>
    %27 = vector.broadcast %cst_13 : f32 to vector<16x128xf32>
    %28 = arith.minimumf %27, %26 : vector<16x128xf32>
    %cst_14 = arith.constant 2.000000e+00 : f32
    %29 = vector.broadcast %cst_14 : f32 to vector<16x128xf32>
    %30 = arith.mulf %29, %15 : vector<16x128xf32>
    %31 = math.exp %30 : vector<16x128xf32>
    %cst_15 = arith.constant 2.000000e+00 : f32
    %32 = vector.broadcast %cst_15 : f32 to vector<16x128xf32>
    %33 = arith.mulf %32, %20 : vector<16x128xf32>
    %34 = math.exp %33 : vector<16x128xf32>
    %cst_16 = arith.constant 1.000000e+00 : f32
    %35 = vector.broadcast %cst_16 : f32 to vector<16x128xf32>
    %36 = arith.cmpf oeq, %4, %35 : vector<16x128xf32>
    %37 = arith.extui %36 : vector<16x128xi1> to vector<16x128xi32>
    %38 = arith.sitofp %37 : vector<16x128xi32> to vector<16x128xf32>
    %cst_17 = arith.constant 1.000000e+00 : f32
    %39 = vector.broadcast %cst_17 : f32 to vector<16x128xf32>
    %40 = arith.cmpf olt, %4, %39 : vector<16x128xf32>
    %41 = arith.extui %40 : vector<16x128xi1> to vector<16x128xi32>
    %42 = arith.sitofp %41 : vector<16x128xi32> to vector<16x128xf32>
    %cst_18 = arith.constant 1.000000e+00 : f32
    %43 = vector.broadcast %cst_18 : f32 to vector<16x128xf32>
    %44 = arith.subf %43, %4 : vector<16x128xf32>
    %45 = arith.mulf %44, %44 : vector<16x128xf32>
    %46 = arith.mulf %45, %45 : vector<16x128xf32>
    %47 = arith.mulf %24, %34 : vector<16x128xf32>
    %48 = arith.mulf %47, %38 : vector<16x128xf32>
    %49 = arith.mulf %28, %31 : vector<16x128xf32>
    %50 = arith.mulf %49, %46 : vector<16x128xf32>
    %51 = arith.mulf %50, %42 : vector<16x128xf32>
    %cst_19 = arith.constant 1.000000e+00 : f32
    %52 = vector.broadcast %cst_19 : f32 to vector<16x128xf32>
    %53 = arith.subf %52, %5 : vector<16x128xf32>
    %54 = arith.mulf %51, %53 : vector<16x128xf32>
    %55 = arith.addf %48, %54 : vector<16x128xf32>
    %c0_20 = arith.constant 0 : index
    %c0_21 = arith.constant 0 : index
    %c0_22 = arith.constant 0 : index
    %56 = vector.load %arg5[%c0_20, %c0_21, %c0_22] : memref<2x8x128xf32, #tpu.memory_space<vmem>>, vector<1x8x128xf32>
    %57 = vector.shape_cast %56 : vector<1x8x128xf32> to vector<8x128xf32>
    %58 = vector.shape_cast %55 : vector<16x128xf32> to vector<2x8x128xf32>
    %cst_23 = arith.constant dense<0.000000e+00> : vector<8x128xf32>
    %59 = vector.multi_reduction <add>, %58, %cst_23 [0] : vector<2x8x128xf32> to vector<8x128xf32>
    %60 = arith.addf %57, %59 : vector<8x128xf32>
    %c0_24 = arith.constant 0 : index
    %c0_25 = arith.constant 0 : index
    %c0_26 = arith.constant 0 : index
    %61 = vector.load %arg5[%c0_24, %c0_25, %c0_26] : memref<2x8x128xf32, #tpu.memory_space<vmem>>, vector<1x8x128xf32>
    %62 = vector.shape_cast %61 : vector<1x8x128xf32> to vector<8x128xf32>
    %63 = vector.shape_cast %60 : vector<8x128xf32> to vector<1x8x128xf32>
    tpu.vector_store %arg5[%c0_24, %c0_25, %c0_26], %63 {strides = array<i32>} : memref<2x8x128xf32, #tpu.memory_space<vmem>>, vector<1x8x128xf32>,
    %c1 = arith.constant 1 : index
    %c0_27 = arith.constant 0 : index
    %c0_28 = arith.constant 0 : index
    %64 = vector.load %arg5[%c1, %c0_27, %c0_28] : memref<2x8x128xf32, #tpu.memory_space<vmem>>, vector<1x8x128xf32>
    %65 = vector.shape_cast %64 : vector<1x8x128xf32> to vector<8x128xf32>
    %66 = vector.shape_cast %38 : vector<16x128xf32> to vector<2x8x128xf32>
    %cst_29 = arith.constant dense<0.000000e+00> : vector<8x128xf32>
    %67 = vector.multi_reduction <add>, %66, %cst_29 [0] : vector<2x8x128xf32> to vector<8x128xf32>
    %68 = arith.addf %65, %67 : vector<8x128xf32>
    %c1_30 = arith.constant 1 : index
    %c0_31 = arith.constant 0 : index
    %c0_32 = arith.constant 0 : index
    %69 = vector.load %arg5[%c1_30, %c0_31, %c0_32] : memref<2x8x128xf32, #tpu.memory_space<vmem>>, vector<1x8x128xf32>
    %70 = vector.shape_cast %69 : vector<1x8x128xf32> to vector<8x128xf32>
    %71 = vector.shape_cast %68 : vector<8x128xf32> to vector<1x8x128xf32>
    tpu.vector_store %arg5[%c1_30, %c0_31, %c0_32], %71 {strides = array<i32>} : memref<2x8x128xf32, #tpu.memory_space<vmem>>, vector<1x8x128xf32>,
    return
  }
  func.func @transform_0(%arg0: i32, %arg1: i32) -> (i32, i32) {
    %c1_i32 = arith.constant 1 : i32
    %0 = arith.muli %arg0, %c1_i32 : i32
    %1 = arith.addi %0, %arg1 : i32
    %c0_i32 = arith.constant 0 : i32
    %2 = arith.minsi %1, %c0_i32 : i32
    %c0_i32_0 = arith.constant 0 : i32
    %c0_i32_1 = arith.constant 0 : i32
    return %2, %c0_i32_0 : i32, i32
  }
  func.func @transform_1(%arg0: i32, %arg1: i32) -> (i32, i32) {
    %c1_i32 = arith.constant 1 : i32
    %0 = arith.muli %arg0, %c1_i32 : i32
    %1 = arith.addi %0, %arg1 : i32
    %c0_i32 = arith.constant 0 : i32
    %2 = arith.minsi %1, %c0_i32 : i32
    %c0_i32_0 = arith.constant 0 : i32
    %c0_i32_1 = arith.constant 0 : i32
    return %2, %c0_i32_0 : i32, i32
  }
  func.func @transform_2(%arg0: i32, %arg1: i32) -> (i32, i32) {
    %c1_i32 = arith.constant 1 : i32
    %0 = arith.muli %arg0, %c1_i32 : i32
    %1 = arith.addi %0, %arg1 : i32
    %c0_i32 = arith.constant 0 : i32
    %2 = arith.minsi %1, %c0_i32 : i32
    %c0_i32_0 = arith.constant 0 : i32
    %c0_i32_1 = arith.constant 0 : i32
    return %2, %c0_i32_0 : i32, i32
  }
  func.func @transform_3(%arg0: i32, %arg1: i32) -> (i32, i32, i32) {
    %c0_i32 = arith.constant 0 : i32
    %c0_i32_0 = arith.constant 0 : i32
    %c0_i32_1 = arith.constant 0 : i32
    return %arg0, %c0_i32, %c0_i32_0 : i32, i32, i32
  }
}

</mosaic_0001>

<llo_original>
// kernel: focal_loss_pallas.1
$region0: #{focal_loss_pallas.1}
  #allocation0 [shape = 'u32[]', space=smem, size = 0x4, offset = 0x4, fixed_abs, tag = 'smem constant byte address 0x4 - core index']
  #allocation1 [shape = 'u32[72,128]{1,0:T(1,128)}', space=vmem, size = 0x9000, scoped, tag = 'internal scratch']
  %s0 = inlined_call_operand.vmem [shape: f32[16,128], index: 0, kind: input, shape index: {}]
  %s1 = inlined_call_operand.vmem [shape: f32[16,128], index: 1, kind: input, shape index: {}]
  %s2 = inlined_call_operand.vmem [shape: f32[16,128], index: 2, kind: input, shape index: {}]
  %s3 = inlined_call_operand.vmem [shape: f32[2,8,128], index: 3, kind: output, shape index: {}]
  %s4 = sld [smem:[#allocation0]]
  $region26: #{focal_loss_pallas.1} parent=0
    _
  %s6 = ssub.s32 1, %s4
  %s7 = scalar_select 0, %s6, %s4
  // Predicated region
  $region2: #{focal_loss_pallas.1} parent=0 // pred_check
    _
  $region3: #{focal_loss_pallas.1} parent=0 // pred_check_branch
    %9 = sbr.rel (0) target = $region5
  $region4: #{focal_loss_pallas.1} parent=0 // pred_region
    %s10 = sadd.s32 0, 0
    %p11 = scmp.lt.s32.totalorder %s10, 0
    %s12 = scalar_select %p11, %s10, 0
    %s13 = smul.u32 2, %s12
    %p14 = scmp.lt.s32.totalorder %s13, 1
    %s15 = scalar_select %p14, %s13, 1
    %s16 = smul.addr %s15, 8
    %s17 = scalar_lea.vmem %s0, %s16
    %s18 = sadd.s32 0, 0
    %p19 = scmp.lt.s32.totalorder %s18, 0
    %s20 = scalar_select %p19, %s18, 0
    %s21 = smul.u32 2, %s20
  $region5: #{focal_loss_pallas.1} parent=0 // pred_fallthru
    _
  // Predicated region
  $region6: #{focal_loss_pallas.1} parent=0 // pred_check
    _
  $region7: #{focal_loss_pallas.1} parent=0 // pred_check_branch
    %23 = sbr.rel (0) target = $region9
  $region8: #{focal_loss_pallas.1} parent=0 // pred_region
    %s24 = sadd.s32 0, 0
    %p25 = scmp.lt.s32.totalorder %s24, 0
    %s26 = scalar_select %p25, %s24, 0
    %s27 = smul.u32 2, %s26
    %p28 = scmp.lt.s32.totalorder %s27, 1
    %s29 = scalar_select %p28, %s27, 1
    %s30 = smul.addr %s29, 8
    %s31 = scalar_lea.vmem %s1, %s30
    %s32 = sadd.s32 0, 0
    %p33 = scmp.lt.s32.totalorder %s32, 0
    %s34 = scalar_select %p33, %s32, 0
    %s35 = smul.u32 2, %s34
  $region9: #{focal_loss_pallas.1} parent=0 // pred_fallthru
    _
  // Predicated region
  $region10: #{focal_loss_pallas.1} parent=0 // pred_check
    _
  $region11: #{focal_loss_pallas.1} parent=0 // pred_check_branch
    %37 = sbr.rel (0) target = $region13
  $region12: #{focal_loss_pallas.1} parent=0 // pred_region
    %s38 = sadd.s32 0, 0
    %p39 = scmp.lt.s32.totalorder %s38, 0
    %s40 = scalar_select %p39, %s38, 0
    %s41 = smul.u32 2, %s40
    %p42 = scmp.lt.s32.totalorder %s41, 1
    %s43 = scalar_select %p42, %s41, 1
    %s44 = smul.addr %s43, 8
    %s45 = scalar_lea.vmem %s2, %s44
    %s46 = sadd.s32 0, 0
    %p47 = scmp.lt.s32.totalorder %s46, 0
    %s48 = scalar_select %p47, %s46, 0
    %s49 = smul.u32 2, %s48
  $region13: #{focal_loss_pallas.1} parent=0 // pred_fallthru
    _
  %s50 = sadd.s32 0, 0
  %p51 = scmp.lt.s32.totalorder %s50, 0
  %s52 = scalar_select %p51, %s50, 0
  %s53 = smul.u32 2, %s52
  %p54 = scmp.lt.s32.totalorder %s53, 1
  %s55 = scalar_select %p54, %s53, 1
  %s56 = smul.addr %s55, 8
  %s57 = scalar_lea.vmem %s0, %s56
  %s58 = sadd.s32 0, 0
  %p59 = scmp.lt.s32.totalorder %s58, 0
  %s60 = scalar_select %p59, %s58, 0
  %s61 = smul.u32 2, %s60
  %p62 = scmp.lt.s32.totalorder %s61, 1
  %s63 = scalar_select %p62, %s61, 1
  %s64 = smul.addr %s63, 8
  %s65 = scalar_lea.vmem %s1, %s64
  %s66 = sadd.s32 0, 0
  %p67 = scmp.lt.s32.totalorder %s66, 0
  %s68 = scalar_select %p67, %s66, 0
  %s69 = smul.u32 2, %s68
  %p70 = scmp.lt.s32.totalorder %s69, 1
  %s71 = scalar_select %p70, %s69, 1
  %s72 = smul.addr %s71, 8
  %s73 = scalar_lea.vmem %s2, %s72
  %s74 = sadd.s32 0, 0
  %p75 = scmp.lt.s32.totalorder %s74, 0
  %s76 = scalar_select %p75, %s74, 0
  %s77 = smul.u32 2, %s76
  %p78 = scmp.lt.s32.totalorder %s77, 1
  %s79 = scalar_select %p78, %s77, 1
  %s80 = smul.addr %s79, 8
  %s81 = scalar_lea.vmem %s0, %s80
  %s82 = sadd.s32 0, 0
  %p83 = scmp.lt.s32.totalorder %s82, 0
  %s84 = scalar_select %p83, %s82, 0
  %s85 = smul.u32 2, %s84
  %s86 = sadd.s32 0, 0
  %p87 = scmp.lt.s32.totalorder %s86, 0
  %s88 = scalar_select %p87, %s86, 0
  %s89 = smul.u32 2, %s88
  %p90 = scmp.lt.s32.totalorder %s89, 1
  %s91 = scalar_select %p90, %s89, 1
  %s92 = smul.addr %s91, 8
  %s93 = scalar_lea.vmem %s1, %s92
  %s94 = sadd.s32 0, 0
  %p95 = scmp.lt.s32.totalorder %s94, 0
  %s96 = scalar_select %p95, %s94, 0
  %s97 = smul.u32 2, %s96
  %s98 = sadd.s32 0, 0
  %p99 = scmp.lt.s32.totalorder %s98, 0
  %s100 = scalar_select %p99, %s98, 0
  %s101 = smul.u32 2, %s100
  %p102 = scmp.lt.s32.totalorder %s101, 1
  %s103 = scalar_select %p102, %s101, 1
  %s104 = smul.addr %s103, 8
  %s105 = scalar_lea.vmem %s2, %s104
  %s106 = sadd.s32 0, 0
  %p107 = scmp.lt.s32.totalorder %s106, 0
  %s108 = scalar_select %p107, %s106, 0
  %s109 = smul.u32 2, %s108
  %p110 = scmp.eq.s32.totalorder 0, 0
  // Predicated region
  $region14: #{focal_loss_pallas.1} parent=0 // pred_check
    %p111 = pneg %p110
  $region15: #{focal_loss_pallas.1} parent=0 // pred_check_branch
    %113 = sbr.rel (%p111) target = $region17
  $region16: #{focal_loss_pallas.1} parent=0 // pred_region
    %114 = vst [vmem:[%s3] sm:$0xff] 0.0
    %115 = vst [vmem:[%s3 + $0x8] sm:$0xff] 0.0
  $region17: #{focal_loss_pallas.1} parent=0 // pred_fallthru
    _
  %v116 = vld [vmem:[%s81] sm:$0xff]
  %v117 = vld [vmem:[%s81 + $0x8] sm:$0xff]
  %v118 = vld [vmem:[%s93] sm:$0xff]
  %v119 = vld [vmem:[%s93 + $0x8] sm:$0xff]
  %v120 = vld [vmem:[%s105] sm:$0xff]
  %v121 = vld [vmem:[%s105 + $0x8] sm:$0xff]
  %v122 = vand.u32 2147483647, %v116
  %v123 = vand.u32 2147483647, %v117
  %v124 = vsub.f32 0.0, %v122
  %v125 = vsub.f32 0.0, %v123
  %v126 = vmul.f32 %v124, 1.442695
  %v127 = vpow.pop %v126
  %v128 = vmul.f32 %v125, 1.442695
  %v129 = vpow.pop %v128
  %v130 = vadd.f32 %v127, 1.0
  %v131 = vadd.f32 %v129, 1.0
  %v132 = vlog2.pop %v130
  %v133 = vmul.f32 %v132, 0.6931472
  %v134 = vlog2.pop %v131
  %v135 = vmul.f32 %v134, 0.6931472
  %v136 = vmin.f32 %v116, 0.0
  %v137 = vmin.f32 %v117, 0.0
  %v138 = vsub.f32 %v136, %v133
  %v139 = vsub.f32 %v137, %v135
  %v140 = vmax.f32 %v116, 0.0
  %v141 = vmax.f32 %v117, 0.0
  %v142 = vsub.f32 0.0, %v140
  %v143 = vsub.f32 0.0, %v141
  %v144 = vsub.f32 %v142, %v133
  %v145 = vsub.f32 %v143, %v135
  %v146 = vmax.f32 %v138, -9.2103405
  %v147 = vmax.f32 %v139, -9.2103405
  %v148 = vmin.f32 %v146, -0.000100005
  %v149 = vmin.f32 %v147, -0.000100005
  %v150 = vmax.f32 %v144, -9.2103405
  %v151 = vmax.f32 %v145, -9.2103405
  %v152 = vmin.f32 %v150, -0.000100005
  %v153 = vmin.f32 %v151, -0.000100005
  %v154 = vmul.f32 %v138, 2.0
  %v155 = vmul.f32 %v139, 2.0
  %v156 = vmul.f32 %v154, 1.442695
  %v157 = vpow.pop %v156
  %v158 = vmul.f32 %v155, 1.442695
  %v159 = vpow.pop %v158
  %v160 = vmul.f32 %v144, 2.0
  %v161 = vmul.f32 %v145, 2.0
  %v162 = vmul.f32 %v160, 1.442695
  %v163 = vpow.pop %v162
  %v164 = vmul.f32 %v161, 1.442695
  %v165 = vpow.pop %v164
  %vm166 = vcmp.eq.f32.partialorder %v118, 1.0
  %vm167 = vcmp.eq.f32.partialorder %v119, 1.0
  %v168 = vsel %vm166, 1, 0
  %v169 = vsel %vm167, 1, 0
  %v170 = vcvt.s32.f32 %v168
  %v171 = vcvt.s32.f32 %v169
  %vm172 = vcmp.lt.f32.partialorder %v118, 1.0
  %vm173 = vcmp.lt.f32.partialorder %v119, 1.0
  %v174 = vsel %vm172, 1, 0
  %v175 = vsel %vm173, 1, 0
  %v176 = vcvt.s32.f32 %v174
  %v177 = vcvt.s32.f32 %v175
  %v178 = vsub.f32 1.0, %v118
  %v179 = vsub.f32 1.0, %v119
  %v180 = vmul.f32 %v178, %v178
  %v181 = vmul.f32 %v179, %v179
  %v182 = vmul.f32 %v180, %v180
  %v183 = vmul.f32 %v181, %v181
  %v184 = vmul.f32 %v148, %v163
  %v185 = vmul.f32 %v149, %v165
  %v186 = vmul.f32 %v184, %v170
  %v187 = vmul.f32 %v185, %v171
  %v188 = vmul.f32 %v152, %v157
  %v189 = vmul.f32 %v153, %v159
  %v190 = vmul.f32 %v188, %v182
  %v191 = vmul.f32 %v189, %v183
  %v192 = vmul.f32 %v190, %v176
  %v193 = vmul.f32 %v191, %v177
  %v194 = vsub.f32 1.0, %v120
  %v195 = vsub.f32 1.0, %v121
  %v196 = vmul.f32 %v192, %v194
  %v197 = vmul.f32 %v193, %v195
  %v198 = vadd.f32 %v186, %v196
  %v199 = vadd.f32 %v187, %v197
  %v200 = vld [vmem:[%s3] sm:$0xff]
  %v201 = vadd.f32 %v198, %v199
  %v202 = vadd.f32 %v200, %v201
  %203 = vst [vmem:[%s3] sm:$0xff] %v202
  %s204 = scalar_lea.vmem %s3, 8
  %v205 = vld [vmem:[%s204] sm:$0xff]
  %v206 = vadd.f32 %v170, %v171
  %v207 = vadd.f32 %v205, %v206
  %208 = vst [vmem:[%s204] sm:$0xff] %v207
  // Predicated region
  $region18: #{focal_loss_pallas.1} parent=0 // pred_check
    _
  $region19: #{focal_loss_pallas.1} parent=0 // pred_check_branch
    %210 = sbr.rel (0) target = $region21
  $region20: #{focal_loss_pallas.1} parent=0 // pred_region
    _
  $region21: #{focal_loss_pallas.1} parent=0 // pred_fallthru
    _
  // Predicated region
  $region22: #{focal_loss_pallas.1} parent=0 // pred_check
    _
  $region23: #{focal_loss_pallas.1} parent=0 // pred_check_branch
    %212 = sbr.rel (0) target = $region25
  $region24: #{focal_loss_pallas.1} parent=0 // pred_region
    _
  $region25: #{focal_loss_pallas.1} parent=0 // pred_fallthru
    _

</llo_original>
